<compile_context>
chip_gen: v7x
topology: tpu7x:2x2x1
jax: 0.10.0
libtpu: 0.0.40
codegen_flags: <defaults>
</compile_context>

<pallas_src>
import functools

import jax
import jax.numpy as jnp
import numpy as np
from jax.experimental import pallas as pl
from jax.experimental.pallas import tpu as pltpu


# --------------------------------------------------------------------------- #
# Pallas kernels: one batch element per grid step.
# --------------------------------------------------------------------------- #
def _attend(x_proj, y_proj, y, mask, out_ref):
    f32 = jnp.float32
    # scores[i, j] = <x_proj[i], y_proj[j]>  -- contract feature axis of both,
    # no explicit transpose of y_proj.
    scores = jax.lax.dot_general(
        x_proj, y_proj,
        dimension_numbers=(((1,), (1,)), ((), ())),
        preferred_element_type=f32)                          # (L1, L2)

    neg = jnp.float32(-1e30)
    masked = jnp.where(mask > 0.5, neg, scores)              # broadcast (1,L2)

    # softmax over the lane (L2) axis
    m = jnp.max(masked, axis=-1, keepdims=True)
    e = jnp.exp(masked - m)
    denom = jnp.sum(e, axis=-1, keepdims=True)
    alpha = e / denom                                        # (L1, L2)

    out_ref[0] = jnp.dot(alpha, y, preferred_element_type=f32).astype(
        out_ref.dtype)


def seq_attn_match_linear_kernel(
    x_ref,       # (1, L1, H)
    y_ref,       # (1, L2, H)
    ymask_ref,   # (1, 1, L2)   1.0 = padded / masked
    w_ref,       # (H, H)       nn.Linear weight (row i = output feature i)
    b_ref,       # (1, H)       nn.Linear bias
    out_ref,     # (1, L1, H)
):
    f32 = jnp.float32
    x = x_ref[0].astype(f32)              # (L1, H)
    y = y_ref[0].astype(f32)              # (L2, H)
    mask = ymask_ref[0]                   # (1, L2)
    w = w_ref[...].astype(f32)            # (H, H)
    bias = b_ref[...].astype(f32)         # (1, H)

    # x @ W^T + b, relu  (contract feature axes; no transposed weight needed)
    dn = (((1,), (1,)), ((), ()))
    x_proj = jnp.maximum(
        jax.lax.dot_general(x, w, dn, preferred_element_type=f32) + bias, 0.0)
    y_proj = jnp.maximum(
        jax.lax.dot_general(y, w, dn, preferred_element_type=f32) + bias, 0.0)

    _attend(x_proj, y_proj, y, mask, out_ref)


def seq_attn_match_identity_kernel(
    x_ref,       # (1, L1, H)
    y_ref,       # (1, L2, H)
    ymask_ref,   # (1, 1, L2)
    out_ref,     # (1, L1, H)
):
    f32 = jnp.float32
    x = x_ref[0].astype(f32)
    y = y_ref[0].astype(f32)
    mask = ymask_ref[0]
    _attend(x, y, y, mask, out_ref)


# --------------------------------------------------------------------------- #
# Wrapper
# --------------------------------------------------------------------------- #
def seq_attn_match_forward(x, y, y_mask, weight=None, bias=None):
    """x: (B,L1,H), y: (B,L2,H), y_mask: (B,L2) (1/True = pad).
    weight/bias: nn.Linear(H, H) parameters (weight shape (H,H), bias (H,));
    if weight is None the identity path (SeqAttnMatch(identity=True)) is used.
    """
    B, L1, H = x.shape
    L2 = y.shape[1]
    f32 = jnp.float32
    use_linear = weight is not None

    x = x.astype(f32)
    y = y.astype(f32)
    mask3 = y_mask.astype(f32).reshape(B, 1, L2)

    in_specs = [
        pl.BlockSpec((1, L1, H), lambda b: (b, 0, 0)),   # x    (per-batch tile)
        pl.BlockSpec((1, L2, H), lambda b: (b, 0, 0)),   # y
        pl.BlockSpec((1, 1, L2), lambda b: (b, 0, 0)),   # y_mask
    ]
    operands = [x, y, mask3]

    if use_linear:
        kernel = seq_attn_match_linear_kernel
        w = jnp.asarray(weight, f32)                     # (H, H)
        b2 = jnp.asarray(bias, f32).reshape(1, H)        # (1, H)
        in_specs += [
            pl.BlockSpec((H, H), lambda b: (0, 0)),      # W    (grid-resident)
            pl.BlockSpec((1, H), lambda b: (0, 0)),      # bias (grid-resident)
        ]
        operands += [w, b2]
    else:
        kernel = seq_attn_match_identity_kernel

    out = pl.pallas_call(
        kernel,
        out_shape=jax.ShapeDtypeStruct((B, L1, H), f32),
        grid=(B,),
        in_specs=in_specs,
        out_specs=pl.BlockSpec((1, L1, H), lambda b: (b, 0, 0)),
        compiler_params=pltpu.CompilerParams(
            dimension_semantics=("parallel",),
            vmem_limit_bytes=96 * 1024 * 1024),
    )(*operands)
    return out


# --------------------------------------------------------------------------- #
# Pure-JAX reference (mirrors the PyTorch module, eval mode)
# --------------------------------------------------------------------------- #
def seq_attn_match_ref(x, y, y_mask, weight=None, bias=None):
    if weight is not None:
        x_proj = jax.nn.relu(x @ weight.T + bias)
        y_proj = jax.nn.relu(y @ weight.T + bias)
    else:
        x_proj, y_proj = x, y
    scores = jnp.einsum("bih,bjh->bij", x_proj, y_proj)
    scores = jnp.where(y_mask[:, None, :] > 0.5, -jnp.inf, scores)
    alpha = jax.nn.softmax(scores, axis=-1)
    return jnp.einsum("bij,bjh->bih", alpha, y)


# --------------------------------------------------------------------------- #
if __name__ == "__main__":
    B, L1, L2, H = 2, 8, 12, 32

    key = jax.random.PRNGKey(0)
    k_x, k_y, k_w, k_b = jax.random.split(key, 4)

    x = jax.random.normal(k_x, (B, L1, H), jnp.float32)
    y = jax.random.normal(k_y, (B, L2, H), jnp.float32)

    # padded batch: lengths (12, 7); mask == 1 at padded key positions
    lengths = jnp.array([L2, 7], jnp.int32)
    y_mask = (jnp.arange(L2)[None, :] >= lengths[:, None]).astype(jnp.float32)

    weight = jax.random.normal(k_w, (H, H), jnp.float32) * 0.1   # nn.Linear(H, H).weight
    bias = jax.random.normal(k_b, (H,), jnp.float32) * 0.1       # nn.Linear(H, H).bias

    out = seq_attn_match_forward(x, y, y_mask, weight, bias)
    jax.block_until_ready(out)

    ref = seq_attn_match_ref(x, y, y_mask, weight, bias)
    np.testing.assert_allclose(np.asarray(out), np.asarray(ref), rtol=1e-4, atol=1e-4)

    # identity path (SeqAttnMatch(identity=True))
    out_id = seq_attn_match_forward(x, y, y_mask, None, None)
    jax.block_until_ready(out_id)
    ref_id = seq_attn_match_ref(x, y, y_mask, None, None)
    np.testing.assert_allclose(np.asarray(out_id), np.asarray(ref_id), rtol=1e-4, atol=1e-4)

    print("KERNEL_OK")
</pallas_src>

<mosaic_0001>
module attributes {stable_mosaic.version = 11 : i64} {
  func.func @seq_attn_match_linear_kernel(%arg0: i32, %arg1: memref<1x8x32xf32, #tpu.memory_space<vmem>>, %arg2: memref<1x12x32xf32, #tpu.memory_space<vmem>>, %arg3: memref<1x1x12xf32, #tpu.memory_space<vmem>>, %arg4: memref<32x32xf32, #tpu.memory_space<vmem>>, %arg5: memref<1x32xf32, #tpu.memory_space<vmem>>, %arg6: memref<1x8x32xf32, #tpu.memory_space<vmem>>) attributes {dimension_semantics = [#tpu.dimension_semantics<parallel>], iteration_bounds = array<i64: 2>, scalar_prefetch = 0 : i64, scratch_operands = 0 : i64, tpu.core_type = #tpu.core_type<tc>, window_params = [{transform_indices = @transform_0, window_bounds = array<i64: 1, 8, 32>}, {transform_indices = @transform_1, window_bounds = array<i64: 1, 12, 32>}, {transform_indices = @transform_2, window_bounds = array<i64: 1, 1, 12>}, {pipeline_mode = #tpu.pipeline_mode<synchronous>, transform_indices = @transform_3, window_bounds = array<i64: 32, 32>}, {pipeline_mode = #tpu.pipeline_mode<synchronous>, transform_indices = @transform_4, window_bounds = array<i64: 1, 32>}, {transform_indices = @transform_5, window_bounds = array<i64: 1, 8, 32>}]} {
    %c0 = arith.constant 0 : index
    %c0_0 = arith.constant 0 : index
    %c0_1 = arith.constant 0 : index
    %0 = vector.load %arg1[%c0, %c0_0, %c0_1] : memref<1x8x32xf32, #tpu.memory_space<vmem>>, vector<1x8x32xf32>
    %1 = vector.shape_cast %0 : vector<1x8x32xf32> to vector<8x32xf32>
    %c0_2 = arith.constant 0 : index
    %c0_3 = arith.constant 0 : index
    %c0_4 = arith.constant 0 : index
    %2 = vector.load %arg2[%c0_2, %c0_3, %c0_4] : memref<1x12x32xf32, #tpu.memory_space<vmem>>, vector<1x12x32xf32>
    %3 = vector.shape_cast %2 : vector<1x12x32xf32> to vector<12x32xf32>
    %c0_5 = arith.constant 0 : index
    %c0_6 = arith.constant 0 : index
    %c0_7 = arith.constant 0 : index
    %4 = vector.load %arg3[%c0_5, %c0_6, %c0_7] : memref<1x1x12xf32, #tpu.memory_space<vmem>>, vector<1x1x12xf32>
    %5 = vector.shape_cast %4 : vector<1x1x12xf32> to vector<1x12xf32>
    %c0_8 = arith.constant 0 : index
    %c0_9 = arith.constant 0 : index
    %6 = vector.load %arg4[%c0_8, %c0_9] : memref<32x32xf32, #tpu.memory_space<vmem>>, vector<32x32xf32>
    %c0_10 = arith.constant 0 : index
    %c0_11 = arith.constant 0 : index
    %7 = vector.load %arg5[%c0_10, %c0_11] : memref<1x32xf32, #tpu.memory_space<vmem>>, vector<1x32xf32>
    %cst = arith.constant dense<0.000000e+00> : vector<8x32xf32>
    %8 = tpu.matmul %1, %6, %cst {dimension_numbers = #tpu.dot_dimension_numbers<[1], [1], [0], [0], [0, 0, 1, 0], [], []>} : vector<8x32xf32>, vector<32x32xf32>, vector<8x32xf32> -> vector<8x32xf32>
    %9 = vector.broadcast %7 : vector<1x32xf32> to vector<8x32xf32>
    %10 = arith.addf %8, %9 : vector<8x32xf32>
    %cst_12 = arith.constant 0.000000e+00 : f32
    %11 = vector.broadcast %cst_12 : f32 to vector<8x32xf32>
    %12 = arith.maximumf %10, %11 : vector<8x32xf32>
    %cst_13 = arith.constant dense<0.000000e+00> : vector<12x32xf32>
    %13 = tpu.matmul %3, %6, %cst_13 {dimension_numbers = #tpu.dot_dimension_numbers<[1], [1], [0], [0], [0, 0, 1, 0], [], []>} : vector<12x32xf32>, vector<32x32xf32>, vector<12x32xf32> -> vector<12x32xf32>
    %14 = vector.broadcast %7 : vector<1x32xf32> to vector<12x32xf32>
    %15 = arith.addf %13, %14 : vector<12x32xf32>
    %cst_14 = arith.constant 0.000000e+00 : f32
    %16 = vector.broadcast %cst_14 : f32 to vector<12x32xf32>
    %17 = arith.maximumf %15, %16 : vector<12x32xf32>
    %cst_15 = arith.constant dense<0.000000e+00> : vector<8x12xf32>
    %18 = tpu.matmul %12, %17, %cst_15 {dimension_numbers = #tpu.dot_dimension_numbers<[1], [1], [0], [0], [0, 0, 1, 0], [], []>} : vector<8x32xf32>, vector<12x32xf32>, vector<8x12xf32> -> vector<8x12xf32>
    %cst_16 = arith.constant 5.000000e-01 : f32
    %19 = vector.broadcast %cst_16 : f32 to vector<1x12xf32>
    %20 = arith.cmpf ogt, %5, %19 : vector<1x12xf32>
    %cst_17 = arith.constant -1.000000e+30 : f32
    %21 = vector.shape_cast %20 : vector<1x12xi1> to vector<1x12xi1>
    %22 = vector.broadcast %21 : vector<1x12xi1> to vector<8x12xi1>
    %23 = vector.broadcast %cst_17 : f32 to vector<8x12xf32>
    %24 = arith.select %22, %23, %18 : vector<8x12xi1>, vector<8x12xf32>
    %cst_18 = arith.constant dense<0xFF800000> : vector<8xf32>
    %25 = vector.multi_reduction <maximumf>, %24, %cst_18 [1] : vector<8x12xf32> to vector<8xf32>
    %26 = vector.shape_cast %25 : vector<8xf32> to vector<8x1xf32>
    %27 = vector.broadcast %26 : vector<8x1xf32> to vector<8x12xf32>
    %28 = arith.subf %24, %27 : vector<8x12xf32>
    %29 = math.exp %28 : vector<8x12xf32>
    %cst_19 = arith.constant dense<0.000000e+00> : vector<8xf32>
    %30 = vector.multi_reduction <add>, %29, %cst_19 [1] : vector<8x12xf32> to vector<8xf32>
    %31 = vector.shape_cast %30 : vector<8xf32> to vector<8x1xf32>
    %32 = vector.broadcast %31 : vector<8x1xf32> to vector<8x12xf32>
    %33 = arith.divf %29, %32 : vector<8x12xf32>
    %cst_20 = arith.constant dense<0.000000e+00> : vector<8x32xf32>
    %34 = tpu.matmul %33, %3, %cst_20 {dimension_numbers = #tpu.dot_dimension_numbers<[1], [0], [0], [1], [0, 0, 1, 1], [], []>} : vector<8x12xf32>, vector<12x32xf32>, vector<8x32xf32> -> vector<8x32xf32>
    %c0_21 = arith.constant 0 : index
    %c0_22 = arith.constant 0 : index
    %c0_23 = arith.constant 0 : index
    %35 = vector.load %arg6[%c0_21, %c0_22, %c0_23] : memref<1x8x32xf32, #tpu.memory_space<vmem>>, vector<1x8x32xf32>
    %36 = vector.shape_cast %35 : vector<1x8x32xf32> to vector<8x32xf32>
    %37 = vector.shape_cast %34 : vector<8x32xf32> to vector<1x8x32xf32>
    tpu.vector_store %arg6[%c0_21, %c0_22, %c0_23], %37 {strides = array<i32>} : memref<1x8x32xf32, #tpu.memory_space<vmem>>, vector<1x8x32xf32>,
    return
  }
  func.func @transform_0(%arg0: i32) -> (i32, i32, i32) {
    %c0_i32 = arith.constant 0 : i32
    %c0_i32_0 = arith.constant 0 : i32
    %c0_i32_1 = arith.constant 0 : i32
    return %arg0, %c0_i32, %c0_i32_0 : i32, i32, i32
  }
  func.func @transform_1(%arg0: i32) -> (i32, i32, i32) {
    %c0_i32 = arith.constant 0 : i32
    %c0_i32_0 = arith.constant 0 : i32
    %c0_i32_1 = arith.constant 0 : i32
    return %arg0, %c0_i32, %c0_i32_0 : i32, i32, i32
  }
  func.func @transform_2(%arg0: i32) -> (i32, i32, i32) {
    %c0_i32 = arith.constant 0 : i32
    %c0_i32_0 = arith.constant 0 : i32
    %c0_i32_1 = arith.constant 0 : i32
    return %arg0, %c0_i32, %c0_i32_0 : i32, i32, i32
  }
  func.func @transform_3(%arg0: i32) -> (i32, i32) {
    %c0_i32 = arith.constant 0 : i32
    %c0_i32_0 = arith.constant 0 : i32
    %c0_i32_1 = arith.constant 0 : i32
    return %c0_i32, %c0_i32_0 : i32, i32
  }
  func.func @transform_4(%arg0: i32) -> (i32, i32) {
    %c0_i32 = arith.constant 0 : i32
    %c0_i32_0 = arith.constant 0 : i32
    %c0_i32_1 = arith.constant 0 : i32
    return %c0_i32, %c0_i32_0 : i32, i32
  }
  func.func @transform_5(%arg0: i32) -> (i32, i32, i32) {
    %c0_i32 = arith.constant 0 : i32
    %c0_i32_0 = arith.constant 0 : i32
    %c0_i32_1 = arith.constant 0 : i32
    return %arg0, %c0_i32, %c0_i32_0 : i32, i32, i32
  }
}

</mosaic_0001>

<llo_original>
// kernel: tpu_custom_call.1
$region0: #{tpu_custom_call.1}
  #allocation0 [shape = 'u32[]', space=smem, size = 0x4, offset = 0x4, fixed_abs, tag = 'smem constant byte address 0x4 - core index']
  #allocation1 [shape = 'u32[144,128]{1,0:T(1,128)}', space=vmem, size = 0x12000, scoped, tag = 'internal scratch']
  %s0 = inlined_call_operand.hbm [shape: f32[2,8,32], index: 0, kind: input, shape index: {}]
  %s1 = inlined_call_operand.hbm [shape: f32[2,12,32], index: 1, kind: input, shape index: {}]
  %s2 = inlined_call_operand.hbm [shape: f32[2,1,12], index: 2, kind: input, shape index: {}]
  %s3 = inlined_call_operand.hbm [shape: f32[32,32], index: 3, kind: input, shape index: {}]
  %s4 = inlined_call_operand.hbm [shape: f32[1,32], index: 4, kind: input, shape index: {}]
  %s5 = inlined_call_operand.hbm [shape: f32[2,8,32], index: 5, kind: output, shape index: {}]
  %s6 = sld [smem:[#allocation0]]
  $region73: #{tpu_custom_call.1} parent=0
    _
  %s8 = ssub.s32 1, %s6
  %s9 = scalar_select 0, %s8, %s6
  $region1: #{tpu_custom_call.1} parent=0
    #allocation2 [shape = 'u8[8192]{0}', space=vmem, size = 0x2000, scoped, tag = 'input window, operand 0']
    #allocation3 [shape = 's32[2]{0}', space=sflag, size = 0x8, scoped, tag = 'scoped memory for tpu_custom_call.1']
    #allocation4 [shape = 's32[2]{0}', space=sflag, size = 0x8, scoped, tag = 'scoped memory for tpu_custom_call.1']
    #allocation5 [shape = 'u8[16384]{0}', space=vmem, size = 0x4000, scoped, tag = 'input window, operand 1']
    #allocation6 [shape = 's32[2]{0}', space=sflag, size = 0x8, scoped, tag = 'scoped memory for tpu_custom_call.1']
    #allocation7 [shape = 'u8[1024]{0}', space=vmem, size = 0x400, scoped, tag = 'input window, operand 2']
    #allocation8 [shape = 'u8[16384]{0}', space=vmem, size = 0x4000, scoped, tag = 'input window, operand 3, single buffered']
    #allocation9 [shape = 's32[1]{0}', space=sflag, size = 0x4, scoped, tag = 'scoped memory for tpu_custom_call.1']
    #allocation10 [shape = 'u8[512]{0}', space=vmem, size = 0x400, scoped, tag = 'input window, operand 4, single buffered']
    #allocation11 [shape = 'u8[8192]{0}', space=vmem, size = 0x2000, scoped, tag = 'output window, operand 0']
    %10 = vsyncpa [#allocation3], 0
    %s11 = scalar_lea.sflag [#allocation3], 1
    %12 = vsyncpa %s11, 0
    %13 = vsyncpa [#allocation6], 0
    %s14 = scalar_lea.sflag [#allocation6], 1
    %15 = vsyncpa %s14, 0
    %16 = vsyncpa [#allocation9], 0
    %17 = vsyncpa [#allocation4], 0
    %s18 = scalar_lea.sflag [#allocation4], 1
    %19 = vsyncpa %s18, 0
    loop: start=0, step=1, limit=4
    $region2: #{tpu_custom_call.1} parent=1 // loop_pre_header
      _
    $region3: #{tpu_custom_call.1} parent=1 // loop_header
      %s21 = sphi 0, %s25
      %p22 = scmp.ge.s32.totalorder %s21, 4
      %s31 = sphi 0, %s33
      %s34 = sphi 0, %s31
      %s35 = sphi 0, %s34
      %s51 = sphi 0, %s35
      %s57 = sphi 0, %s59
      %s60 = sphi 0, %s57
      %s61 = sphi 0, %s60
      %s77 = sphi 0, %s61
      %s83 = sphi 0, %s85
      %s86 = sphi 0, %s83
      %s87 = sphi 0, %s86
      %s103 = sphi 0, %s87
      %s107 = sphi 0, %s107
      %s109 = sphi 0, %s107
      %s110 = sphi 0, %s109
      %s124 = sphi 0, %s110
      %s128 = sphi 0, %s128
      %s130 = sphi 0, %s128
      %s131 = sphi 0, %s130
      %s145 = sphi 0, %s131
      %s151 = sphi 0, %s153
      %s154 = sphi 0, %s151
      %s155 = sphi 0, %s154
      %s171 = sphi 0, %s155
    $region4: #{tpu_custom_call.1} parent=1 // loop_header_branch
      %24 = sbr.rel (%p22) target = $region8
    $region5: #{tpu_custom_call.1} parent=1 // loop_body
      %s26 = ssub.s32 %s21, 1
      %s27 = ssub.s32 %s21, 2
      %s28 = sadd.s32 %s21, 1
      %s29 = ssub.s32 %s21, %s28
      %p30 = scmp.eq.s32.totalorder %s29, 0
      %s32 = sadd.s32 %s31, 1
      %s33 = scalar_select %p30, %s31, %s32
      %p36 = pneg %p30
      %p37 = scmp.eq.s32.totalorder %s21, 1
      %p38 = por %p36, %p37
      %p39 = scmp.ne.s32.totalorder %s31, %s34
      %p40 = scmp.eq.s32.totalorder %s21, 0
      %p41 = por %p39, %p40
      %p42 = scmp.ne.s32.totalorder %s31, %s34
      %p43 = scmp.eq.s32.totalorder %s26, 1
      %p44 = por %p42, %p43
      %p45 = scmp.ne.s32.totalorder %s34, %s35
      %p46 = scmp.eq.s32.totalorder %s26, 0
      %p47 = por %p45, %p46
      %p48 = scmp.ne.s32.totalorder %s34, %s35
      %p49 = scmp.eq.s32.totalorder %s27, 1
      %p50 = por %p48, %p49
      %p52 = scmp.ne.s32.totalorder %s35, %s51
      %p53 = scmp.eq.s32.totalorder %s27, 0
      %p54 = por %p52, %p53
      %s55 = ssub.s32 %s21, %s28
      %p56 = scmp.eq.s32.totalorder %s55, 0
      %s58 = sadd.s32 %s57, 1
      %s59 = scalar_select %p56, %s57, %s58
      %p62 = pneg %p56
      %p63 = scmp.eq.s32.totalorder %s21, 1
      %p64 = por %p62, %p63
      %p65 = scmp.ne.s32.totalorder %s57, %s60
      %p66 = scmp.eq.s32.totalorder %s21, 0
      %p67 = por %p65, %p66
      %p68 = scmp.ne.s32.totalorder %s57, %s60
      %p69 = scmp.eq.s32.totalorder %s26, 1
      %p70 = por %p68, %p69
      %p71 = scmp.ne.s32.totalorder %s60, %s61
      %p72 = scmp.eq.s32.totalorder %s26, 0
      %p73 = por %p71, %p72
      %p74 = scmp.ne.s32.totalorder %s60, %s61
      %p75 = scmp.eq.s32.totalorder %s27, 1
      %p76 = por %p74, %p75
      %p78 = scmp.ne.s32.totalorder %s61, %s77
      %p79 = scmp.eq.s32.totalorder %s27, 0
      %p80 = por %p78, %p79
      %s81 = ssub.s32 %s21, %s28
      %p82 = scmp.eq.s32.totalorder %s81, 0
      %s84 = sadd.s32 %s83, 1
      %s85 = scalar_select %p82, %s83, %s84
      %p88 = pneg %p82
      %p89 = scmp.eq.s32.totalorder %s21, 1
      %p90 = por %p88, %p89
      %p91 = scmp.ne.s32.totalorder %s83, %s86
      %p92 = scmp.eq.s32.totalorder %s21, 0
      %p93 = por %p91, %p92
      %p94 = scmp.ne.s32.totalorder %s83, %s86
      %p95 = scmp.eq.s32.totalorder %s26, 1
      %p96 = por %p94, %p95
      %p97 = scmp.ne.s32.totalorder %s86, %s87
      %p98 = scmp.eq.s32.totalorder %s26, 0
      %p99 = por %p97, %p98
      %p100 = scmp.ne.s32.totalorder %s86, %s87
      %p101 = scmp.eq.s32.totalorder %s27, 1
      %p102 = por %p100, %p101
      %p104 = scmp.ne.s32.totalorder %s87, %s103
      %p105 = scmp.eq.s32.totalorder %s27, 0
      %p106 = por %p104, %p105
      %s108 = sadd.s32 %s107, 1
      %p111 = scmp.eq.s32.totalorder %s21, 1
      %p112 = scmp.ne.s32.totalorder %s107, %s109
      %p113 = scmp.eq.s32.totalorder %s21, 0
      %p114 = por %p112, %p113
      %p115 = scmp.ne.s32.totalorder %s107, %s109
      %p116 = scmp.eq.s32.totalorder %s26, 1
      %p117 = por %p115, %p116
      %p118 = scmp.ne.s32.totalorder %s109, %s110
      %p119 = scmp.eq.s32.totalorder %s26, 0
      %p120 = por %p118, %p119
      %p121 = scmp.ne.s32.totalorder %s109, %s110
      %p122 = scmp.eq.s32.totalorder %s27, 1
      %p123 = por %p121, %p122
      %p125 = scmp.ne.s32.totalorder %s110, %s124
      %p126 = scmp.eq.s32.totalorder %s27, 0
      %p127 = por %p125, %p126
      %s129 = sadd.s32 %s128, 1
      %p132 = scmp.eq.s32.totalorder %s21, 1
      %p133 = scmp.ne.s32.totalorder %s128, %s130
      %p134 = scmp.eq.s32.totalorder %s21, 0
      %p135 = por %p133, %p134
      %p136 = scmp.ne.s32.totalorder %s128, %s130
      %p137 = scmp.eq.s32.totalorder %s26, 1
      %p138 = por %p136, %p137
      %p139 = scmp.ne.s32.totalorder %s130, %s131
      %p140 = scmp.eq.s32.totalorder %s26, 0
      %p141 = por %p139, %p140
      %p142 = scmp.ne.s32.totalorder %s130, %s131
      %p143 = scmp.eq.s32.totalorder %s27, 1
      %p144 = por %p142, %p143
      %p146 = scmp.ne.s32.totalorder %s131, %s145
      %p147 = scmp.eq.s32.totalorder %s27, 0
      %p148 = por %p146, %p147
      %s149 = ssub.s32 %s21, %s28
      %p150 = scmp.eq.s32.totalorder %s149, 0
      %s152 = sadd.s32 %s151, 1
      %s153 = scalar_select %p150, %s151, %s152
      %p156 = pneg %p150
      %p157 = scmp.eq.s32.totalorder %s21, 1
      %p158 = por %p156, %p157
      %p159 = scmp.ne.s32.totalorder %s151, %s154
      %p160 = scmp.eq.s32.totalorder %s21, 0
      %p161 = por %p159, %p160
      %p162 = scmp.ne.s32.totalorder %s151, %s154
      %p163 = scmp.eq.s32.totalorder %s26, 1
      %p164 = por %p162, %p163
      %p165 = scmp.ne.s32.totalorder %s154, %s155
      %p166 = scmp.eq.s32.totalorder %s26, 0
      %p167 = por %p165, %p166
      %p168 = scmp.ne.s32.totalorder %s154, %s155
      %p169 = scmp.eq.s32.totalorder %s27, 1
      %p170 = por %p168, %p169
      %p172 = scmp.ne.s32.totalorder %s155, %s171
      %p173 = scmp.eq.s32.totalorder %s27, 0
      %p174 = por %p172, %p173
      %p175 = scmp.le.s32.totalorder 1, %s21
      %p176 = scmp.lt.s32.totalorder %s21, 3
      %p177 = pnand %p175, %p176
      %p178 = pneg %p177
      // Predicated region
      $region9: #{tpu_custom_call.1} parent=5 // pred_check
        _
      $region10: #{tpu_custom_call.1} parent=5 // pred_check_branch
        %180 = sbr.rel (%p177) target = $region12
      $region11: #{tpu_custom_call.1} parent=5 // pred_region
        %s181 = ssub.s32 %s21, 1
        // Predicated region
        $region13: #{tpu_custom_call.1} parent=11 // pred_check
          %p182 = pneg %p120
        $region14: #{tpu_custom_call.1} parent=11 // pred_check_branch
          %184 = sbr.rel (%p182) target = $region16
        $region15: #{tpu_custom_call.1} parent=11 // pred_region
          %s186 = ssub.s32 512, 512
          %187 = vsyncadd [#allocation9], %s186
          %s188 = sshll.u32 [#allocation8], 4
          %s189 = int_to_ptr.vmem [resolvable:$true] %s188
          %194 = dma.hbm_to_vmem [thread:$0]  %s3, 512, %s189, [#allocation9], 128, 128, 8
        $region16: #{tpu_custom_call.1} parent=11 // pred_fallthru
          _
        // Predicated region
        $region17: #{tpu_custom_call.1} parent=11 // pred_check
          %p195 = pneg %p141
        $region18: #{tpu_custom_call.1} parent=11 // pred_check_branch
          %197 = sbr.rel (%p195) target = $region20
        $region19: #{tpu_custom_call.1} parent=11 // pred_region
          %s199 = ssub.s32 16, 16
          %200 = vsyncadd [#allocation9], %s199
          %s202 = sshll.u32 [#allocation10], 4
          %s203 = int_to_ptr.vmem [resolvable:$true] %s202
          %205 = dma.hbm_to_vmem [thread:$0]  %s4, 16, %s203, [#allocation9]
        $region20: #{tpu_custom_call.1} parent=11 // pred_fallthru
          _
      $region12: #{tpu_custom_call.1} parent=5 // pred_fallthru
        _
      %p206 = scmp.lt.s32.totalorder %s21, 2
      // Predicated region
      $region21: #{tpu_custom_call.1} parent=5 // pred_check
        %p207 = pneg %p206
      $region22: #{tpu_custom_call.1} parent=5 // pred_check_branch
        %209 = sbr.rel (%p207) target = $region24
      $region23: #{tpu_custom_call.1} parent=5 // pred_region
        // Predicated region
        $region25: #{tpu_custom_call.1} parent=23 // pred_check
          %p210 = pneg %p41
        $region26: #{tpu_custom_call.1} parent=23 // pred_check_branch
          %212 = sbr.rel (%p210) target = $region28
        $region27: #{tpu_custom_call.1} parent=23 // pred_region
          %s213 = sand.u32 %s31, 1
          %s214 = scalar_lea.sflag [#allocation3], %s213
          %s215 = sand.u32 %s31, 1
          %s216 = smul.addr %s215, 8
          %s217 = scalar_lea.vmem [#allocation2], %s216
          %s219 = ssub.s32 128, 128
          %220 = vsyncadd %s214, %s219
          %s221 = smul.addr %s21, 128
          %s222 = scalar_lea.hbm %s0, %s221
          %s224 = sshll.u32 %s217, 4
          %s225 = int_to_ptr.vmem [resolvable:$true] %s224
          %227 = dma.hbm_to_vmem [thread:$0]  %s222, 128, %s225, %s214
        $region28: #{tpu_custom_call.1} parent=23 // pred_fallthru
          _
        // Predicated region
        $region29: #{tpu_custom_call.1} parent=23 // pred_check
          %p228 = pneg %p67
        $region30: #{tpu_custom_call.1} parent=23 // pred_check_branch
          %230 = sbr.rel (%p228) target = $region32
        $region31: #{tpu_custom_call.1} parent=23 // pred_region
          %s231 = sand.u32 %s21, 1
          %s232 = scalar_lea.sflag [#allocation6], %s231
          %s233 = sand.u32 %s57, 1
          %s234 = smul.addr %s233, 16
          %s235 = scalar_lea.vmem [#allocation5], %s234
          %s237 = ssub.s32 256, 256
          %238 = vsyncadd %s232, %s237
          %s239 = smul.addr %s21, 2
          %s240 = smul.addr %s239, 128
          %s241 = scalar_lea.hbm %s1, %s240
          %s242 = sshll.u32 %s235, 4
          %s243 = int_to_ptr.vmem [resolvable:$true] %s242
          %248 = dma.hbm_to_vmem [thread:$0]  %s241, 256, %s243, %s232, 128, 128, 8
        $region32: #{tpu_custom_call.1} parent=23 // pred_fallthru
          _
        // Predicated region
        $region33: #{tpu_custom_call.1} parent=23 // pred_check
          %p249 = pneg %p93
        $region34: #{tpu_custom_call.1} parent=23 // pred_check_branch
          %251 = sbr.rel (%p249) target = $region36
        $region35: #{tpu_custom_call.1} parent=23 // pred_region
          %s252 = sand.u32 %s21, 1
          %s253 = scalar_lea.sflag [#allocation6], %s252
          %s254 = sand.u32 %s83, 1
          %s255 = scalar_lea.vmem [#allocation7], %s254
          %s257 = ssub.s32 16, 16
          %258 = vsyncadd %s253, %s257
          %s259 = smul.addr %s21, 16
          %s260 = scalar_lea.hbm %s2, %s259
          %s262 = sshll.u32 %s255, 4
          %s263 = int_to_ptr.vmem [resolvable:$true] %s262
          %265 = dma.hbm_to_vmem [thread:$0]  %s260, 16, %s263, %s253
        $region36: #{tpu_custom_call.1} parent=23 // pred_fallthru
          _
      $region24: #{tpu_custom_call.1} parent=5 // pred_fallthru
        _
      %p266 = scmp.le.s32.totalorder 1, %s21
      %p267 = scmp.lt.s32.totalorder %s21, 3
      %p268 = pnand %p266, %p267
      %p269 = pneg %p268
      // Predicated region
      $region37: #{tpu_custom_call.1} parent=5 // pred_check
        _
      $region38: #{tpu_custom_call.1} parent=5 // pred_check_branch
        %271 = sbr.rel (%p268) target = $region40
      $region39: #{tpu_custom_call.1} parent=5 // pred_region
        %s272 = ssub.s32 %s21, 1
        %s273 = sand.u32 %s34, 1
        %s274 = scalar_lea.sflag [#allocation3], %s273
        %s275 = sand.u32 %s34, 1
        %s276 = smul.addr %s275, 8
        %s277 = scalar_lea.vmem [#allocation2], %s276
        // Predicated region
        $region41: #{tpu_custom_call.1} parent=39 // pred_check
          %p278 = pneg %p47
        $region42: #{tpu_custom_call.1} parent=39 // pred_check_branch
          %280 = sbr.rel (%p278) target = $region44
        $region43: #{tpu_custom_call.1} parent=39 // pred_region
          %281 = dma.done %s274, 128
        $region44: #{tpu_custom_call.1} parent=39 // pred_fallthru
          _
        %s282 = sand.u32 %s26, 1
        %s283 = scalar_lea.sflag [#allocation6], %s282
        %s284 = sand.u32 %s60, 1
        %s285 = smul.addr %s284, 16
        %s286 = scalar_lea.vmem [#allocation5], %s285
        // Predicated region
        $region45: #{tpu_custom_call.1} parent=39 // pred_check
          %p287 = pneg %p73
        $region46: #{tpu_custom_call.1} parent=39 // pred_check_branch
          %289 = sbr.rel (%p287) target = $region48
        $region47: #{tpu_custom_call.1} parent=39 // pred_region
          %290 = dma.done %s283, 256
        $region48: #{tpu_custom_call.1} parent=39 // pred_fallthru
          _
        %s291 = sand.u32 %s26, 1
        %s292 = scalar_lea.sflag [#allocation6], %s291
        %s293 = sand.u32 %s86, 1
        %s294 = scalar_lea.vmem [#allocation7], %s293
        // Predicated region
        $region49: #{tpu_custom_call.1} parent=39 // pred_check
          %p295 = pneg %p99
        $region50: #{tpu_custom_call.1} parent=39 // pred_check_branch
          %297 = sbr.rel (%p295) target = $region52
        $region51: #{tpu_custom_call.1} parent=39 // pred_region
          %298 = dma.done %s292, 16
        $region52: #{tpu_custom_call.1} parent=39 // pred_fallthru
          _
        // Predicated region
        $region53: #{tpu_custom_call.1} parent=39 // pred_check
          %p299 = pneg %p120
        $region54: #{tpu_custom_call.1} parent=39 // pred_check_branch
          %301 = sbr.rel (%p299) target = $region56
        $region55: #{tpu_custom_call.1} parent=39 // pred_region
          %302 = dma.done [#allocation9], 512
        $region56: #{tpu_custom_call.1} parent=39 // pred_fallthru
          _
        // Predicated region
        $region57: #{tpu_custom_call.1} parent=39 // pred_check
          %p303 = pneg %p141
        $region58: #{tpu_custom_call.1} parent=39 // pred_check_branch
          %305 = sbr.rel (%p303) target = $region60
        $region59: #{tpu_custom_call.1} parent=39 // pred_region
          %306 = dma.done [#allocation9], 16
        $region60: #{tpu_custom_call.1} parent=39 // pred_fallthru
          _
        %s307 = sand.u32 %s34, 1
        %s308 = scalar_lea.sflag [#allocation3], %s307
        %s309 = sand.u32 %s34, 1
        %s310 = smul.addr %s309, 8
        %s311 = scalar_lea.vmem [#allocation2], %s310
        %p312 = pneg %p47
        %p313 = pneg %p44
        %s314 = sand.u32 %s26, 1
        %s315 = scalar_lea.sflag [#allocation6], %s314
        %s316 = sand.u32 %s60, 1
        %s317 = smul.addr %s316, 16
        %s318 = scalar_lea.vmem [#allocation5], %s317
        %p319 = pneg %p73
        %p320 = pneg %p70
        %s321 = sand.u32 %s26, 1
        %s322 = scalar_lea.sflag [#allocation6], %s321
        %s323 = sand.u32 %s86, 1
        %s324 = scalar_lea.vmem [#allocation7], %s323
        %p325 = pneg %p99
        %p326 = pneg %p96
        %p327 = pneg %p120
        %p328 = pneg %p117
        %p329 = pneg %p141
        %p330 = pneg %p138
        %p331 = pneg %p167
        %p332 = pneg %p164
        %s333 = sand.u32 %s154, 1
        %s334 = scalar_lea.sflag [#allocation4], %s333
        %s335 = sand.u32 %s154, 1
        %s336 = smul.addr %s335, 8
        %s337 = scalar_lea.vmem [#allocation11], %s336
        %v338 = vld [vmem:[%s277] sm:$0xff]
        %v339 = vld [vmem:[%s286] sm:$0xff]
        %v340 = vld [vmem:[%s286 + $0x8] sm:$0xf]
        %v341 = vld [vmem:[%s294] sm:$0x1]
        %v342 = vld [vmem:[#allocation8] sm:$0xff]
        %v343 = vld [vmem:[#allocation8 + $0x8] sm:$0xff]
        %v344 = vld [vmem:[#allocation8 + $0x10] sm:$0xff]
        %v345 = vld [vmem:[#allocation8 + $0x18] sm:$0xff]
        %v346 = vld [vmem:[#allocation10] sm:$0x1]
        %v348 = vlaneseq
        %v349 = vshrl.u32 %v348, 7
        %v350 = vsub.s32 0, %v349
        %v351 = vrot.slane %v346, %v350
        %vm353 = vcmask 261120
        %v355 = vsel %vm353, %v338, 0
        %v358 = vsel %vm353, %v342, 0
        %v361 = vsel %vm353, %v343, 0
        %v364 = vsel %vm353, %v344, 0
        %v367 = vsel %vm353, %v345, 0
        %369 = vmatprep.subr.mxu0 0.0
        %370 = vmatpush1.xpose.msra.mxu0 %v358
        %371 = vmatprep.subr.mxu0 0.0
        %372 = vmatpush1.xpose.msra.mxu0 %v361
        %373 = vmatprep.subr.mxu0 0.0
        %374 = vmatpush1.xpose.msra.mxu0 %v364
        %375 = vmatprep.subr.mxu0 0.0
        %376 = vmatpush1.xpose.msra.mxu0 %v367
        %377 = vmatprep.subr.mxu0 0.0
        %378 = vmatpush1.xpose.msra.mxu0 0.0
        %379 = vmatprep.subr.mxu0 0.0
        %380 = vmatpush1.xpose.msra.mxu0 0.0
        %381 = vmatprep.subr.mxu0 0.0
        %382 = vmatpush1.xpose.msra.mxu0 0.0
        %383 = vmatprep.subr.mxu0 0.0
        %384 = vmatpush1.xpose.msra.mxu0 0.0
        %385 = vmatprep.subr.mxu0 0.0
        %386 = vmatpush1.xpose.msra.mxu0 0.0
        %387 = vmatprep.subr.mxu0 0.0
        %388 = vmatpush1.xpose.msra.mxu0 0.0
        %389 = vmatprep.subr.mxu0 0.0
        %390 = vmatpush1.xpose.msra.mxu0 0.0
        %391 = vmatprep.subr.mxu0 0.0
        %392 = vmatpush1.xpose.msra.mxu0 0.0
        %393 = vmatprep.subr.mxu0 0.0
        %394 = vmatpush1.xpose.msra.mxu0 0.0
        %395 = vmatprep.subr.mxu0 0.0
        %396 = vmatpush1.xpose.msra.mxu0 0.0
        %397 = vmatprep.subr.mxu0 0.0
        %398 = vmatpush1.xpose.msra.mxu0 0.0
        %399 = vmatprep.subr.mxu0 0.0
        %400 = vmatpush1.xpose.msra.mxu0 0.0
        %401 = vmatprep.subr.mxu0 0.0
        %402 = vmatpush1.xpose.msra.mxu0 0.0
        %403 = vmatprep.subr.mxu0 0.0
        %404 = vmatpush1.xpose.msra.mxu0 0.0
        %405 = vmatprep.subr.mxu0 0.0
        %406 = vmatpush1.xpose.msra.mxu0 0.0
        %407 = vmatprep.subr.mxu0 0.0
        %408 = vmatpush1.xpose.msra.mxu0 0.0
        %409 = vmatprep.subr.mxu0 0.0
        %410 = vmatpush1.xpose.msra.mxu0 0.0
        %411 = vmatprep.subr.mxu0 0.0
        %412 = vmatpush1.xpose.msra.mxu0 0.0
        %413 = vmatprep.subr.mxu0 0.0
        %414 = vmatpush1.xpose.msra.mxu0 0.0
        %415 = vmatprep.subr.mxu0 0.0
        %416 = vmatpush1.xpose.msra.mxu0 0.0
        %417 = vmatprep.subr.mxu0 0.0
        %418 = vmatpush1.xpose.msra.mxu0 0.0
        %419 = vmatprep.subr.mxu0 0.0
        %420 = vmatpush1.xpose.msra.mxu0 0.0
        %421 = vmatprep.subr.mxu0 0.0
        %422 = vmatpush1.xpose.msra.mxu0 0.0
        %423 = vmatprep.subr.mxu0 0.0
        %424 = vmatpush1.xpose.msra.mxu0 0.0
        %425 = vmatprep.subr.mxu0 0.0
        %426 = vmatpush1.xpose.msra.mxu0 0.0
        %427 = vmatprep.subr.mxu0 0.0
        %428 = vmatpush1.xpose.msra.mxu0 0.0
        %429 = vmatprep.subr.mxu0 0.0
        %430 = vmatpush1.xpose.msra.mxu0 0.0
        %431 = vmatprep.subr.mxu0 0.0
        %432 = vmatpush1.xpose.msra.mxu0 0.0
        %433 = vmatprep.mubr.f32.mxu0 0.0
        %434 = vmatmul.mubr.f32.gmra.mrb[0].mxu0 %v355
        %v435 = vpop.f32.mrb[0].mxu0
        %v436 = vadd.f32 %v351, %v435
        %v437 = vpop.f32.mrb[0].mxu0
        %438 = vdwg.mxu0
        %v439 = vmax.f32 %v436, 0.0
        %v441 = vsel %vm353, %v339, 0
        %v444 = vsel %vm353, %v340, 0
        %446 = vmatprep.subr.mxu0 0.0
        %447 = vmatpush1.xpose.msra.mxu0 %v358
        %448 = vmatprep.subr.mxu0 0.0
        %449 = vmatpush1.xpose.msra.mxu0 %v361
        %450 = vmatprep.subr.mxu0 0.0
        %451 = vmatpush1.xpose.msra.mxu0 %v364
        %452 = vmatprep.subr.mxu0 0.0
        %453 = vmatpush1.xpose.msra.mxu0 %v367
        %454 = vmatprep.subr.mxu0 0.0
        %455 = vmatpush1.xpose.msra.mxu0 0.0
        %456 = vmatprep.subr.mxu0 0.0
        %457 = vmatpush1.xpose.msra.mxu0 0.0
        %458 = vmatprep.subr.mxu0 0.0
        %459 = vmatpush1.xpose.msra.mxu0 0.0
        %460 = vmatprep.subr.mxu0 0.0
        %461 = vmatpush1.xpose.msra.mxu0 0.0
        %462 = vmatprep.subr.mxu0 0.0
        %463 = vmatpush1.xpose.msra.mxu0 0.0
        %464 = vmatprep.subr.mxu0 0.0
        %465 = vmatpush1.xpose.msra.mxu0 0.0
        %466 = vmatprep.subr.mxu0 0.0
        %467 = vmatpush1.xpose.msra.mxu0 0.0
        %468 = vmatprep.subr.mxu0 0.0
        %469 = vmatpush1.xpose.msra.mxu0 0.0
        %470 = vmatprep.subr.mxu0 0.0
        %471 = vmatpush1.xpose.msra.mxu0 0.0
        %472 = vmatprep.subr.mxu0 0.0
        %473 = vmatpush1.xpose.msra.mxu0 0.0
        %474 = vmatprep.subr.mxu0 0.0
        %475 = vmatpush1.xpose.msra.mxu0 0.0
        %476 = vmatprep.subr.mxu0 0.0
        %477 = vmatpush1.xpose.msra.mxu0 0.0
        %478 = vmatprep.subr.mxu0 0.0
        %479 = vmatpush1.xpose.msra.mxu0 0.0
        %480 = vmatprep.subr.mxu0 0.0
        %481 = vmatpush1.xpose.msra.mxu0 0.0
        %482 = vmatprep.subr.mxu0 0.0
        %483 = vmatpush1.xpose.msra.mxu0 0.0
        %484 = vmatprep.subr.mxu0 0.0
        %485 = vmatpush1.xpose.msra.mxu0 0.0
        %486 = vmatprep.subr.mxu0 0.0
        %487 = vmatpush1.xpose.msra.mxu0 0.0
        %488 = vmatprep.subr.mxu0 0.0
        %489 = vmatpush1.xpose.msra.mxu0 0.0
        %490 = vmatprep.subr.mxu0 0.0
        %491 = vmatpush1.xpose.msra.mxu0 0.0
        %492 = vmatprep.subr.mxu0 0.0
        %493 = vmatpush1.xpose.msra.mxu0 0.0
        %494 = vmatprep.subr.mxu0 0.0
        %495 = vmatpush1.xpose.msra.mxu0 0.0
        %496 = vmatprep.subr.mxu0 0.0
        %497 = vmatpush1.xpose.msra.mxu0 0.0
        %498 = vmatprep.subr.mxu0 0.0
        %499 = vmatpush1.xpose.msra.mxu0 0.0
        %500 = vmatprep.subr.mxu0 0.0
        %501 = vmatpush1.xpose.msra.mxu0 0.0
        %502 = vmatprep.subr.mxu0 0.0
        %503 = vmatpush1.xpose.msra.mxu0 0.0
        %504 = vmatprep.subr.mxu0 0.0
        %505 = vmatpush1.xpose.msra.mxu0 0.0
        %506 = vmatprep.subr.mxu0 0.0
        %507 = vmatpush1.xpose.msra.mxu0 0.0
        %508 = vmatprep.subr.mxu0 0.0
        %509 = vmatpush1.xpose.msra.mxu0 0.0
        %510 = vmatprep.mubr.f32.mxu0 0.0
        %511 = vmatmul.mubr.f32.gmra.mrb[0].mxu0 %v441
        %v512 = vpop.f32.mrb[0].mxu0
        %v513 = vadd.f32 %v351, %v512
        %v514 = vpop.f32.mrb[0].mxu0
        %515 = vmatprep.mubr.f32.mxu0 0.0
        %516 = vmatmul.mubr.f32.gmra.mrb[0].mxu0 %v444
        %v517 = vpop.f32.mrb[0].mxu0
        %v518 = vadd.f32 %v351, %v517
        %v519 = vpop.f32.mrb[0].mxu0
        %520 = vdwg.mxu0
        %v521 = vmax.f32 %v513, 0.0
        %v522 = vmax.f32 %v518, 0.0
        %v524 = vsel %vm353, %v439, 0
        %v527 = vsel %vm353, %v521, 0
        %v530 = vsel %vm353, %v522, 0
        %532 = vmatprep.subr.mxu0 0.0
        %533 = vmatpush1.xpose.msra.mxu0 %v527
        %534 = vmatprep.subr.mxu0 0.0
        %535 = vmatpush1.xpose.msra.mxu0 %v530
        %536 = vmatprep.subr.mxu0 0.0
        %537 = vmatpush1.xpose.msra.mxu0 0.0
        %538 = vmatprep.subr.mxu0 0.0
        %539 = vmatpush1.xpose.msra.mxu0 0.0
        %540 = vmatprep.subr.mxu0 0.0
        %541 = vmatpush1.xpose.msra.mxu0 0.0
        %542 = vmatprep.subr.mxu0 0.0
        %543 = vmatpush1.xpose.msra.mxu0 0.0
        %544 = vmatprep.subr.mxu0 0.0
        %545 = vmatpush1.xpose.msra.mxu0 0.0
        %546 = vmatprep.subr.mxu0 0.0
        %547 = vmatpush1.xpose.msra.mxu0 0.0
        %548 = vmatprep.subr.mxu0 0.0
        %549 = vmatpush1.xpose.msra.mxu0 0.0
        %550 = vmatprep.subr.mxu0 0.0
        %551 = vmatpush1.xpose.msra.mxu0 0.0
        %552 = vmatprep.subr.mxu0 0.0
        %553 = vmatpush1.xpose.msra.mxu0 0.0
        %554 = vmatprep.subr.mxu0 0.0
        %555 = vmatpush1.xpose.msra.mxu0 0.0
        %556 = vmatprep.subr.mxu0 0.0
        %557 = vmatpush1.xpose.msra.mxu0 0.0
        %558 = vmatprep.subr.mxu0 0.0
        %559 = vmatpush1.xpose.msra.mxu0 0.0
        %560 = vmatprep.subr.mxu0 0.0
        %561 = vmatpush1.xpose.msra.mxu0 0.0
        %562 = vmatprep.subr.mxu0 0.0
        %563 = vmatpush1.xpose.msra.mxu0 0.0
        %564 = vmatprep.subr.mxu0 0.0
        %565 = vmatpush1.xpose.msra.mxu0 0.0
        %566 = vmatprep.subr.mxu0 0.0
        %567 = vmatpush1.xpose.msra.mxu0 0.0
        %568 = vmatprep.subr.mxu0 0.0
        %569 = vmatpush1.xpose.msra.mxu0 0.0
        %570 = vmatprep.subr.mxu0 0.0
        %571 = vmatpush1.xpose.msra.mxu0 0.0
        %572 = vmatprep.subr.mxu0 0.0
        %573 = vmatpush1.xpose.msra.mxu0 0.0
        %574 = vmatprep.subr.mxu0 0.0
        %575 = vmatpush1.xpose.msra.mxu0 0.0
        %576 = vmatprep.subr.mxu0 0.0
        %577 = vmatpush1.xpose.msra.mxu0 0.0
        %578 = vmatprep.subr.mxu0 0.0
        %579 = vmatpush1.xpose.msra.mxu0 0.0
        %580 = vmatprep.subr.mxu0 0.0
        %581 = vmatpush1.xpose.msra.mxu0 0.0
        %582 = vmatprep.subr.mxu0 0.0
        %583 = vmatpush1.xpose.msra.mxu0 0.0
        %584 = vmatprep.subr.mxu0 0.0
        %585 = vmatpush1.xpose.msra.mxu0 0.0
        %586 = vmatprep.subr.mxu0 0.0
        %587 = vmatpush1.xpose.msra.mxu0 0.0
        %588 = vmatprep.subr.mxu0 0.0
        %589 = vmatpush1.xpose.msra.mxu0 0.0
        %590 = vmatprep.subr.mxu0 0.0
        %591 = vmatpush1.xpose.msra.mxu0 0.0
        %592 = vmatprep.subr.mxu0 0.0
        %593 = vmatpush1.xpose.msra.mxu0 0.0
        %594 = vmatprep.subr.mxu0 0.0
        %595 = vmatpush1.xpose.msra.mxu0 0.0
        %596 = vmatprep.mubr.f32.mxu0 0.0
        %597 = vmatmul.mubr.f32.gmra.mrb[0].mxu0 %v524
        %v598 = vpop.f32.mrb[0].mxu0
        %v599 = vadd.f32 0.0, %v598
        %v600 = vpop.f32.mrb[0].mxu0
        %601 = vdwg.mxu0
        %vm602 = vcmp.gt.f32.partialorder %v341, 0.5
        %v603 = vsel %vm602, 1, 0
        %v604 = vlaneseq
        %v605 = vshrl.u32 %v604, 7
        %v606 = vsub.s32 0, %v605
        %v607 = vrot.slane %v603, %v606
        %vm608 = vcmp.eq.s32.totalorder %v607, 1
        %v609 = vsel %vm608, -1e+30, %v599
        %vm610 = vcmask 97280
        %v611 = vsel %vm610, %v609, -inf
        %612 = vmax.xlane.f32.xlu0 %v611
        %v613 = vpop.xlane.xlu0 %612
        %v614 = vsub.f32 %v609, %v613
        %v615 = vmul.f32 %v614, 1.442695
        %v616 = vpow.pop %v615
        %v617 = vsel %vm610, %v616, 0.0
        %618 = vadd.xlane.f32.xlu0 %v617
        %v619 = vpop.xlane.xlu0 %618
        %v620 = vrcp.pop %v619
        %v621 = vmul.f32 %v616, %v620
        %v623 = vsel %vm610, %v621, 0
        %vm625 = vcmask 1043456
        %v626 = vsel %vm625, %v340, 0
        %628 = vmatprep.subr.mxu0 0.0
        %629 = vmatpush1.msra.mxu0 %v339
        %630 = vmatprep.subr.mxu0 0.0
        %631 = vmatpush1.msra.mxu0 %v626
        %632 = vmatprep.subr.mxu0 0.0
        %633 = vmatpush1.msra.mxu0 0.0
        %634 = vmatprep.subr.mxu0 0.0
        %635 = vmatpush1.msra.mxu0 0.0
        %636 = vmatprep.subr.mxu0 0.0
        %637 = vmatpush1.msra.mxu0 0.0
        %638 = vmatprep.subr.mxu0 0.0
        %639 = vmatpush1.msra.mxu0 0.0
        %640 = vmatprep.subr.mxu0 0.0
        %641 = vmatpush1.msra.mxu0 0.0
        %642 = vmatprep.subr.mxu0 0.0
        %643 = vmatpush1.msra.mxu0 0.0
        %644 = vmatprep.subr.mxu0 0.0
        %645 = vmatpush1.msra.mxu0 0.0
        %646 = vmatprep.subr.mxu0 0.0
        %647 = vmatpush1.msra.mxu0 0.0
        %648 = vmatprep.subr.mxu0 0.0
        %649 = vmatpush1.msra.mxu0 0.0
        %650 = vmatprep.subr.mxu0 0.0
        %651 = vmatpush1.msra.mxu0 0.0
        %652 = vmatprep.subr.mxu0 0.0
        %653 = vmatpush1.msra.mxu0 0.0
        %654 = vmatprep.subr.mxu0 0.0
        %655 = vmatpush1.msra.mxu0 0.0
        %656 = vmatprep.subr.mxu0 0.0
        %657 = vmatpush1.msra.mxu0 0.0
        %658 = vmatprep.subr.mxu0 0.0
        %659 = vmatpush1.msra.mxu0 0.0
        %660 = vmatprep.subr.mxu0 0.0
        %661 = vmatpush1.msra.mxu0 0.0
        %662 = vmatprep.subr.mxu0 0.0
        %663 = vmatpush1.msra.mxu0 0.0
        %664 = vmatprep.subr.mxu0 0.0
        %665 = vmatpush1.msra.mxu0 0.0
        %666 = vmatprep.subr.mxu0 0.0
        %667 = vmatpush1.msra.mxu0 0.0
        %668 = vmatprep.subr.mxu0 0.0
        %669 = vmatpush1.msra.mxu0 0.0
        %670 = vmatprep.subr.mxu0 0.0
        %671 = vmatpush1.msra.mxu0 0.0
        %672 = vmatprep.subr.mxu0 0.0
        %673 = vmatpush1.msra.mxu0 0.0
        %674 = vmatprep.subr.mxu0 0.0
        %675 = vmatpush1.msra.mxu0 0.0
        %676 = vmatprep.subr.mxu0 0.0
        %677 = vmatpush1.msra.mxu0 0.0
        %678 = vmatprep.subr.mxu0 0.0
        %679 = vmatpush1.msra.mxu0 0.0
        %680 = vmatprep.subr.mxu0 0.0
        %681 = vmatpush1.msra.mxu0 0.0
        %682 = vmatprep.subr.mxu0 0.0
        %683 = vmatpush1.msra.mxu0 0.0
        %684 = vmatprep.subr.mxu0 0.0
        %685 = vmatpush1.msra.mxu0 0.0
        %686 = vmatprep.subr.mxu0 0.0
        %687 = vmatpush1.msra.mxu0 0.0
        %688 = vmatprep.subr.mxu0 0.0
        %689 = vmatpush1.msra.mxu0 0.0
        %690 = vmatprep.subr.mxu0 0.0
        %691 = vmatpush1.msra.mxu0 0.0
        %692 = vmatprep.mubr.f32.mxu0 0.0
        %693 = vmatmul.mubr.f32.gmra.mrb[0].mxu0 %v623
        %v694 = vpop.f32.mrb[0].mxu0
        %v695 = vadd.f32 0.0, %v694
        %v696 = vpop.f32.mrb[0].mxu0
        %697 = vdwg.mxu0
        %698 = vst.msk [vmem:[%s337] sm:$0xff] %vm353, %v695
        %s699 = sand.u32 %s154, 1
        %s700 = scalar_lea.sflag [#allocation4], %s699
        %s701 = sand.u32 %s154, 1
        %s702 = smul.addr %s701, 8
        %s703 = scalar_lea.vmem [#allocation11], %s702
        // Predicated region
        $region61: #{tpu_custom_call.1} parent=39 // pred_check
          %p704 = pneg %p164
        $region62: #{tpu_custom_call.1} parent=39 // pred_check_branch
          %706 = sbr.rel (%p704) target = $region64
        $region63: #{tpu_custom_call.1} parent=39 // pred_region
          %s708 = ssub.s32 128, 128
          %709 = vsyncadd %s700, %s708
          %s710 = smul.addr %s26, 128
          %s711 = scalar_lea.hbm %s5, %s710
          %s713 = sshll.u32 %s703, 4
          %s714 = int_to_ptr.vmem [resolvable:$true] %s713
          %716 = dma.vmem_to_hbm [thread:$0]  %s714, 128, %s711, %s700
        $region64: #{tpu_custom_call.1} parent=39 // pred_fallthru
          _
      $region40: #{tpu_custom_call.1} parent=5 // pred_fallthru
        _
      %p717 = scmp.le.s32.totalorder 2, %s21
      // Predicated region
      $region65: #{tpu_custom_call.1} parent=5 // pred_check
        %p718 = pneg %p717
      $region66: #{tpu_custom_call.1} parent=5 // pred_check_branch
        %720 = sbr.rel (%p718) target = $region68
      $region67: #{tpu_custom_call.1} parent=5 // pred_region
        %s721 = ssub.s32 %s21, 2
        // Predicated region
        $region69: #{tpu_custom_call.1} parent=67 // pred_check
          %p722 = pneg %p170
        $region70: #{tpu_custom_call.1} parent=67 // pred_check_branch
          %724 = sbr.rel (%p722) target = $region72
        $region71: #{tpu_custom_call.1} parent=67 // pred_region
          %s725 = sand.u32 %s155, 1
          %s726 = scalar_lea.sflag [#allocation4], %s725
          %s727 = sand.u32 %s155, 1
          %s728 = smul.addr %s727, 8
          %s729 = scalar_lea.vmem [#allocation11], %s728
          %730 = dma.done %s726, 128
        $region72: #{tpu_custom_call.1} parent=67 // pred_fallthru
          _
      $region68: #{tpu_custom_call.1} parent=5 // pred_fallthru
        _
    $region6: #{tpu_custom_call.1} parent=1 // loop_footer
      %s25 = sadd.s32 1, %s21
    $region7: #{tpu_custom_call.1} parent=1 // loop_footer_branch
      %20 = sbr.rel target = $region3
    $region8: #{tpu_custom_call.1} parent=1 // loop_exit
      _
    %731 = vsyncpa [#allocation3], 1
    %s732 = scalar_lea.sflag [#allocation3], 1
    %733 = vsyncpa %s732, 1
    %734 = vsyncpa [#allocation6], 1
    %s735 = scalar_lea.sflag [#allocation6], 1
    %736 = vsyncpa %s735, 1
    %737 = vsyncpa [#allocation9], 1
    %738 = vsyncpa [#allocation4], 1
    %s739 = scalar_lea.sflag [#allocation4], 1
    %740 = vsyncpa %s739, 1

</llo_original>
